<compile_context>
chip_gen: v6e
topology: v6e:2x2x1
jax: 0.10.0
libtpu: 0.0.40
codegen_flags: <defaults>
</compile_context>

<pallas_src>
import functools

import jax
import jax.numpy as jnp
from jax.experimental import pallas as pl
from jax.experimental.pallas import tpu as pltpu


def _make_spd_increase_dim_kernel(n_in: int, n_out: int):
    """Kernel closure over the static sizes."""

    def kernel(x_ref, o_ref):
        # x_ref : (TB, n_in,  n_in)   block of input matrices
        # o_ref : (TB, n_out, n_out)  block of output matrices
        #
        # 1) Initialise the whole output block with the padded-diagonal term
        #    (ones at positions (i, i) for i >= n_in, zeros elsewhere).
        #    Generated in-kernel from iota -- we never DMA a dense `add`.
        row = jax.lax.broadcasted_iota(jnp.int32, (n_out, n_out), 0)
        col = jax.lax.broadcasted_iota(jnp.int32, (n_out, n_out), 1)
        diag_pad = jnp.where((row == col) & (row >= n_in), 1.0, 0.0).astype(
            o_ref.dtype
        )
        o_ref[...] = jnp.broadcast_to(diag_pad[None], o_ref.shape)

        # 2) Copy the input into the top-left (n_in, n_in) corner.
        #    (The padded diagonal is zero there, so no overlap issues.)
        o_ref[:, :n_in, :n_in] = x_ref[...].astype(o_ref.dtype)

    return kernel


def spd_increase_dim(x, output_size: int, *, block_b: int | None = None):
    """x: (B, in, in) f32 -> (B, out, out) f32 (SPDIncreaseDim.forward)."""
    B, n_in, n_in2 = x.shape
    assert n_in == n_in2, "input must be batched square matrices"
    n_out = int(output_size)
    assert n_out >= n_in, "output_size must be >= input_size"

    # Batch several matrices per grid step so the ~0.35 us/step overhead and
    # tiny DMAs are amortized (per-step blocks are a few KB per matrix here).
    if block_b is None:
        block_b = min(B, 128)
    grid = (pl.cdiv(B, block_b),)

    # Memory-bound pad: tell XLA's scheduler this is cheap / bandwidth-bound.
    bytes_accessed = B * (n_in * n_in + n_out * n_out) * 4
    cost = pl.CostEstimate(flops=0, transcendentals=0, bytes_accessed=bytes_accessed)

    # Explicit VMEM budget: 2x double-buffered (input block + output block),
    # capped well under the v7x 64 MiB physical VMEM.
    per_step_bytes = block_b * (n_in * n_in + n_out * n_out) * 4
    vmem_limit = min(max(4 * per_step_bytes + (1 << 20), 16 << 20), 48 << 20)

    return pl.pallas_call(
        _make_spd_increase_dim_kernel(n_in, n_out),
        out_shape=jax.ShapeDtypeStruct((B, n_out, n_out), jnp.float32),
        grid_spec=pltpu.PrefetchScalarGridSpec(
            num_scalar_prefetch=0,
            grid=grid,
            in_specs=[
                # Last two block dims equal the full array dims -> (8,128) rule OK.
                pl.BlockSpec((block_b, n_in, n_in), lambda b: (b, 0, 0)),
            ],
            out_specs=pl.BlockSpec((block_b, n_out, n_out), lambda b: (b, 0, 0)),
        ),
        compiler_params=pltpu.CompilerParams(
            # Batch axis is embarrassingly parallel (2x on v7x's two TCs;
            # harmless no-op on single-TC v5e/v6e).
            dimension_semantics=("parallel",),
            vmem_limit_bytes=vmem_limit,
        ),
        cost_estimate=cost,
    )(x)


def make_reference_params(input_size: int, output_size: int):
    """Exact analogue of SPDIncreaseDim.__init__ buffers (for the reference check)."""
    eye = jnp.eye(output_size, input_size, dtype=jnp.float32)  # (out, in)
    add_diag = jnp.concatenate(
        [
            jnp.zeros((input_size,), jnp.float32),
            jnp.ones((output_size - input_size,), jnp.float32),
        ]
    )
    add = jnp.diag(add_diag)  # (out, out)
    return eye, add


if __name__ == "__main__":
    B, n_in, n_out = 2, 16, 32

    key = jax.random.PRNGKey(0)
    a = jax.random.normal(key, (B, n_in, n_in), dtype=jnp.float32)
    # SPD-like (symmetric PSD) input, as the module name implies.
    x = jnp.einsum("bij,bkj->bik", a, a)

    out = spd_increase_dim(x, n_out)
    out = jax.block_until_ready(out)

    # Reference: the original baddbmm math with the explicit eye / add buffers.
    eye, add = make_reference_params(n_in, n_out)
    ref = add[None] + jnp.einsum("oi,bij,pj->bop", eye, x, eye)

    assert out.shape == (B, n_out, n_out)
    assert jnp.allclose(out, ref, atol=1e-5, rtol=1e-5)

    print("KERNEL_OK")
</pallas_src>

<mosaic_0001>
module attributes {stable_mosaic.version = 11 : i64} {
  func.func @kernel(%arg0: i32, %arg1: memref<2x16x16xf32, #tpu.memory_space<vmem>>, %arg2: memref<2x32x32xf32, #tpu.memory_space<vmem>>) attributes {dimension_semantics = [#tpu.dimension_semantics<parallel>], iteration_bounds = array<i64: 1>, scalar_prefetch = 0 : i64, scratch_operands = 0 : i64, tpu.core_type = #tpu.core_type<tc>, window_params = [{transform_indices = @transform_0, window_bounds = array<i64: 2, 16, 16>}, {transform_indices = @transform_1, window_bounds = array<i64: 2, 32, 32>}]} {
    %0 = tpu.iota {dimensions = array<i32: 0>} : vector<32x32xi32>
    %1 = tpu.iota {dimensions = array<i32: 1>} : vector<32x32xi32>
    %2 = arith.cmpi eq, %0, %1 : vector<32x32xi32>
    %c16_i32 = arith.constant 16 : i32
    %3 = vector.broadcast %c16_i32 : i32 to vector<32x32xi32>
    %4 = arith.cmpi sge, %0, %3 : vector<32x32xi32>
    %5 = arith.andi %2, %4 : vector<32x32xi1>
    %cst = arith.constant 1.000000e+00 : f32
    %cst_0 = arith.constant 0.000000e+00 : f32
    %6 = vector.broadcast %cst : f32 to vector<32x32xf32>
    %7 = vector.broadcast %cst_0 : f32 to vector<32x32xf32>
    %8 = arith.select %5, %6, %7 : vector<32x32xi1>, vector<32x32xf32>
    %9 = vector.shape_cast %8 : vector<32x32xf32> to vector<1x32x32xf32>
    %10 = vector.shape_cast %9 : vector<1x32x32xf32> to vector<1x32x32xf32>
    %11 = vector.broadcast %10 : vector<1x32x32xf32> to vector<2x32x32xf32>
    %c0 = arith.constant 0 : index
    %c0_1 = arith.constant 0 : index
    %c0_2 = arith.constant 0 : index
    %12 = vector.load %arg2[%c0, %c0_1, %c0_2] : memref<2x32x32xf32, #tpu.memory_space<vmem>>, vector<2x32x32xf32>
    tpu.vector_store %arg2[%c0, %c0_1, %c0_2], %11 {strides = array<i32>} : memref<2x32x32xf32, #tpu.memory_space<vmem>>, vector<2x32x32xf32>,
    %c0_3 = arith.constant 0 : index
    %c0_4 = arith.constant 0 : index
    %c0_5 = arith.constant 0 : index
    %13 = vector.load %arg1[%c0_3, %c0_4, %c0_5] : memref<2x16x16xf32, #tpu.memory_space<vmem>>, vector<2x16x16xf32>
    %c0_6 = arith.constant 0 : index
    %c0_7 = arith.constant 0 : index
    %c0_8 = arith.constant 0 : index
    %14 = vector.load %arg2[%c0_6, %c0_7, %c0_8] : memref<2x32x32xf32, #tpu.memory_space<vmem>>, vector<2x16x16xf32>
    tpu.vector_store %arg2[%c0_6, %c0_7, %c0_8], %13 {strides = array<i32>} : memref<2x32x32xf32, #tpu.memory_space<vmem>>, vector<2x16x16xf32>,
    return
  }
  func.func @transform_0(%arg0: i32) -> (i32, i32, i32) {
    %c0_i32 = arith.constant 0 : i32
    %c0_i32_0 = arith.constant 0 : i32
    %c0_i32_1 = arith.constant 0 : i32
    return %arg0, %c0_i32, %c0_i32_0 : i32, i32, i32
  }
  func.func @transform_1(%arg0: i32) -> (i32, i32, i32) {
    %c0_i32 = arith.constant 0 : i32
    %c0_i32_0 = arith.constant 0 : i32
    %c0_i32_1 = arith.constant 0 : i32
    return %arg0, %c0_i32, %c0_i32_0 : i32, i32, i32
  }
}

</mosaic_0001>

<llo_original>
// kernel: tpu_custom_call.1
$region0: #{tpu_custom_call.1}
  #allocation0 [shape = 'u32[]', space=smem, size = 0x4, offset = 0x4, fixed_abs, tag = 'smem constant byte address 0x4 - core index']
  #allocation1 [shape = 'u32[144,128]{1,0:T(1,128)}', space=vmem, size = 0x12000, scoped, tag = 'internal scratch']
  %s0 = inlined_call_operand.hbm [shape: f32[2,16,16], index: 0, kind: input, shape index: {}]
  %s1 = inlined_call_operand.hbm [shape: f32[2,32,32], index: 1, kind: output, shape index: {}]
  %s2 = sld [smem:[#allocation0]]
  $region18: #{tpu_custom_call.1} parent=0
    _
  %s4 = ssub.s32 1, %s2
  %s5 = scalar_select 0, %s4, %s2
  $region1: #{tpu_custom_call.1} parent=0
    #allocation2 [shape = 'u8[16384]{0}', space=vmem, size = 0x4000, scoped, tag = 'input window, operand 0, single buffered']
    #allocation3 [shape = 's32[1]{0}', space=sflag, size = 0x4, scoped, tag = 'scoped memory for tpu_custom_call.1']
    #allocation4 [shape = 's32[1]{0}', space=sflag, size = 0x4, scoped, tag = 'scoped memory for tpu_custom_call.1']
    #allocation5 [shape = 'u8[32768]{0}', space=vmem, size = 0x8000, scoped, tag = 'output window, operand 0, single buffered']
    %6 = vsyncpa [#allocation3], 0
    %7 = vsyncpa [#allocation4], 0
    // Predicated region
    $region2: #{tpu_custom_call.1} parent=1 // pred_check
      _
    $region3: #{tpu_custom_call.1} parent=1 // pred_check_branch
      %9 = sbr.rel (0) target = $region5
    $region4: #{tpu_custom_call.1} parent=1 // pred_region
      %s11 = ssub.s32 512, 512
      %12 = vsyncadd [#allocation3], %s11
      %s13 = sshll.u32 [#allocation2], 4
      %s14 = int_to_ptr.vmem [resolvable:$true] %s13
      %19 = dma.hbm_to_vmem [thread:$0]  %s0, 512, %s14, [#allocation3], 128, 128, 8
    $region5: #{tpu_custom_call.1} parent=1 // pred_fallthru
      _
    // Predicated region
    $region6: #{tpu_custom_call.1} parent=1 // pred_check
      _
    $region7: #{tpu_custom_call.1} parent=1 // pred_check_branch
      %21 = sbr.rel (0) target = $region9
    $region8: #{tpu_custom_call.1} parent=1 // pred_region
      %22 = dma.done [#allocation3], 512
    $region9: #{tpu_custom_call.1} parent=1 // pred_fallthru
      _
    %v23 = vlaneseq
    %v24 = vshrl.u32 %v23, 7
    %v25 = vadd.s32 %v24, 8
    %v26 = vadd.s32 %v24, 16
    %v27 = vadd.s32 %v24, 24
    %v28 = vlaneseq
    %v29 = vand.u32 %v28, 127
    %vm30 = vcmp.eq.s32.totalorder %v24, %v29
    %vm31 = vcmp.eq.s32.totalorder %v25, %v29
    %vm32 = vcmp.eq.s32.totalorder %v26, %v29
    %vm33 = vcmp.eq.s32.totalorder %v27, %v29
    %vm34 = vcmp.ge.s32.totalorder %v24, 16
    %vm35 = vcmp.ge.s32.totalorder %v25, 16
    %vm36 = vcmp.ge.s32.totalorder %v26, 16
    %vm37 = vcmp.ge.s32.totalorder %v27, 16
    %vm38 = vmand %vm30, %vm34
    %vm39 = vmand %vm31, %vm35
    %vm40 = vmand %vm32, %vm36
    %vm41 = vmand %vm33, %vm37
    %v42 = vsel %vm38, 1.0, 0.0
    %v43 = vsel %vm39, 1.0, 0.0
    %v44 = vsel %vm40, 1.0, 0.0
    %v45 = vsel %vm41, 1.0, 0.0
    %vm46 = vcmask 261120
    %47 = vst.msk [vmem:[#allocation5] sm:$0xff] %vm46, %v42
    %48 = vst.msk [vmem:[#allocation5 + $0x8] sm:$0xff] %vm46, %v43
    %49 = vst.msk [vmem:[#allocation5 + $0x10] sm:$0xff] %vm46, %v44
    %50 = vst.msk [vmem:[#allocation5 + $0x18] sm:$0xff] %vm46, %v45
    %51 = vst.msk [vmem:[#allocation5 + $0x20] sm:$0xff] %vm46, %v42
    %52 = vst.msk [vmem:[#allocation5 + $0x28] sm:$0xff] %vm46, %v43
    %53 = vst.msk [vmem:[#allocation5 + $0x30] sm:$0xff] %vm46, %v44
    %54 = vst.msk [vmem:[#allocation5 + $0x38] sm:$0xff] %vm46, %v45
    %v55 = vld [vmem:[#allocation2] sm:$0xff]
    %v56 = vld [vmem:[#allocation2 + $0x8] sm:$0xff]
    %v57 = vld [vmem:[#allocation2 + $0x10] sm:$0xff]
    %v58 = vld [vmem:[#allocation2 + $0x18] sm:$0xff]
    %vm59 = vcmask 130048
    %60 = vst.msk [vmem:[#allocation5] sm:$0xff] %vm59, %v55
    %61 = vst.msk [vmem:[#allocation5 + $0x8] sm:$0xff] %vm59, %v56
    %62 = vst.msk [vmem:[#allocation5 + $0x20] sm:$0xff] %vm59, %v57
    %63 = vst.msk [vmem:[#allocation5 + $0x28] sm:$0xff] %vm59, %v58
    // Predicated region
    $region10: #{tpu_custom_call.1} parent=1 // pred_check
      _
    $region11: #{tpu_custom_call.1} parent=1 // pred_check_branch
      %65 = sbr.rel (0) target = $region13
    $region12: #{tpu_custom_call.1} parent=1 // pred_region
      %s67 = ssub.s32 1024, 1024
      %68 = vsyncadd [#allocation4], %s67
      %s69 = sshll.u32 [#allocation5], 4
      %s70 = int_to_ptr.vmem [resolvable:$true] %s69
      %75 = dma.vmem_to_hbm [thread:$0]  %s70, 1024, %s1, [#allocation4], 128, 128, 8
    $region13: #{tpu_custom_call.1} parent=1 // pred_fallthru
      _
    // Predicated region
    $region14: #{tpu_custom_call.1} parent=1 // pred_check
      _
    $region15: #{tpu_custom_call.1} parent=1 // pred_check_branch
      %77 = sbr.rel (0) target = $region17
    $region16: #{tpu_custom_call.1} parent=1 // pred_region
      %78 = dma.done [#allocation4], 1024
    $region17: #{tpu_custom_call.1} parent=1 // pred_fallthru
      _
    %79 = vsyncpa [#allocation3], 1
    %80 = vsyncpa [#allocation4], 1

</llo_original>
